<compile_context>
chip_gen: v5e
topology: v5e:2x2
jax: 0.10.0
libtpu: 0.0.40
codegen_flags: <defaults>
</compile_context>

<pallas_src>
import math
import functools

import jax
import jax.numpy as jnp
from jax.experimental import pallas as pl
from jax.experimental.pallas import tpu as pltpu


def _round_up(x, m):
    return (x + m - 1) // m * m


def gcn_classifier_kernel(x_ref, adj_ref, wgc_ref, bgc_ref, wmlp_ref, bmlp_ref,
                          out_ref, acc_ref):
    k = pl.program_id(1)

    @pl.when(k == 0)
    def _():
        acc_ref[...] = jnp.zeros_like(acc_ref)

    # Accumulate (adj @ x)[i_tile] over reduction tiles k.  The GraphConv
    # weight is applied once in the epilogue (matmul associativity), so the
    # inner loop carries only the term that depends on k.
    acc_ref[...] += jnp.dot(adj_ref[...], x_ref[...],
                            preferred_element_type=jnp.float32)

    @pl.when(k == pl.num_programs(1) - 1)
    def _():
        # GraphConv weight + bias + ReLU   (dropout == identity in eval mode)
        h = jnp.maximum(
            jnp.dot(acc_ref[...], wgc_ref[...],
                    preferred_element_type=jnp.float32) + bgc_ref[...],
            0.0)
        # classifier head: nn.Linear(nhid, nclass), lane-dense padded to Cp
        logits = jnp.dot(h, wmlp_ref[...],
                         preferred_element_type=jnp.float32) + bmlp_ref[...]
        out_ref[...] = logits.astype(out_ref.dtype)


@functools.partial(jax.jit, static_argnames=("tile",))
def gnn_classifier_forward(x, adj, params, *, tile=128):
    N, H = x.shape
    C = params["w_mlp"].shape[1]

    # Lane-dense padding (exact in f32: padded weight rows/cols are zero,
    # padded adj rows/cols are zero, so real output entries are unchanged).
    Hp = _round_up(H, 128)
    Cp = _round_up(C, 128)
    tile_n = min(tile, _round_up(N, 8))
    Np = _round_up(N, tile_n)

    xp   = jnp.pad(x,               ((0, Np - N), (0, Hp - H)))
    adjp = jnp.pad(adj,             ((0, Np - N), (0, Np - N)))
    wgc  = jnp.pad(params["w_gc"],  ((0, Hp - H), (0, Hp - H)))
    bgc  = jnp.pad(params["b_gc"],  ((0, 0),      (0, Hp - H)))
    wmlp = jnp.pad(params["w_mlp"], ((0, Hp - H), (0, Cp - C)))
    bmlp = jnp.pad(params["b_mlp"], ((0, 0),      (0, Cp - C)))

    grid = (Np // tile_n, Np // tile_n)

    out = pl.pallas_call(
        gcn_classifier_kernel,
        out_shape=jax.ShapeDtypeStruct((Np, Cp), jnp.float32),
        grid_spec=pltpu.PrefetchScalarGridSpec(
            num_scalar_prefetch=0,
            grid=grid,
            in_specs=[
                pl.BlockSpec((tile_n, Hp),     lambda i, k: (k, 0)),   # x
                pl.BlockSpec((tile_n, tile_n), lambda i, k: (i, k)),   # adj
                pl.BlockSpec((Hp, Hp),         lambda i, k: (0, 0)),   # W_gc
                pl.BlockSpec((1, Hp),          lambda i, k: (0, 0)),   # b_gc
                pl.BlockSpec((Hp, Cp),         lambda i, k: (0, 0)),   # W_mlp
                pl.BlockSpec((1, Cp),          lambda i, k: (0, 0)),   # b_mlp
            ],
            out_specs=pl.BlockSpec((tile_n, Cp), lambda i, k: (i, 0)),
            scratch_shapes=[pltpu.VMEM((tile_n, Hp), jnp.float32)],
        ),
        compiler_params=pltpu.CompilerParams(
            dimension_semantics=("parallel", "arbitrary"),
            vmem_limit_bytes=32 * 1024 * 1024,
        ),
    )(xp, adjp, wgc, bgc, wmlp, bmlp)

    return out[:N, :C]


def _reference_forward(x, adj, params):
    """Pure-JAX reference mirroring the PyTorch GNN_Classifier ('gcn', eval)."""
    support = x @ params["w_gc"]
    h = jnp.maximum(adj @ support + params["b_gc"], 0.0)   # GraphConv + ReLU
    # dropout == identity in eval; logit=False path -> final Linear
    return h @ params["w_mlp"] + params["b_mlp"]


def init_params(key, nhid, nclass):
    k1, k2, k3, k4 = jax.random.split(key, 4)
    # GraphConv.reset_parameters: uniform(-1/sqrt(out), 1/sqrt(out))
    stdv = 1.0 / math.sqrt(nhid)
    w_gc = jax.random.uniform(k1, (nhid, nhid), jnp.float32, -stdv, stdv)
    b_gc = jax.random.uniform(k2, (1, nhid), jnp.float32, -stdv, stdv)
    # GNN_Classifier.reset_parameters: mlp.weight ~ N(0, 0.05); stored
    # transposed as [nhid, nclass] so the kernel computes h @ W on the MXU.
    w_mlp = 0.05 * jax.random.normal(k3, (nhid, nclass), jnp.float32)
    b_mlp = jax.random.uniform(k4, (1, nclass), jnp.float32, -stdv, stdv)
    return dict(w_gc=w_gc, b_gc=b_gc, w_mlp=w_mlp, b_mlp=b_mlp)


def make_adj(key, n, p=0.05):
    """Deterministic synthetic dense adjacency: symmetric, self-loops, row-normalized."""
    a = (jax.random.uniform(key, (n, n)) < p).astype(jnp.float32)
    a = jnp.maximum(a, a.T)
    a = a + jnp.eye(n, dtype=jnp.float32)
    deg = jnp.sum(a, axis=1, keepdims=True)
    return a / deg


if __name__ == "__main__":
    key = jax.random.PRNGKey(0)
    k_x, k_adj, k_p = jax.random.split(key, 3)

    N, nhid, nclass = 256, 32, 10
    x = jax.random.normal(k_x, (N, nhid), jnp.float32)
    adj = make_adj(k_adj, N)
    params = init_params(k_p, nhid, nclass)

    # tile=128 -> grid (2, 2): exercises both the parallel node axis and the
    # reduction axis (accumulator init / epilogue paths).
    out = gnn_classifier_forward(x, adj, params, tile=128)
    out = jax.block_until_ready(out)

    ref = _reference_forward(x, adj, params)
    assert out.shape == (N, nclass)
    assert jnp.allclose(out, ref, atol=1e-4, rtol=1e-4), "mismatch vs reference"

    print("KERNEL_OK")
</pallas_src>

<mosaic_0001>
module attributes {stable_mosaic.version = 11 : i64} {
  func.func @gcn_classifier_kernel(%arg0: i32, %arg1: i32, %arg2: memref<128x128xf32, #tpu.memory_space<vmem>>, %arg3: memref<128x128xf32, #tpu.memory_space<vmem>>, %arg4: memref<128x128xf32, #tpu.memory_space<vmem>>, %arg5: memref<1x128xf32, #tpu.memory_space<vmem>>, %arg6: memref<128x128xf32, #tpu.memory_space<vmem>>, %arg7: memref<1x128xf32, #tpu.memory_space<vmem>>, %arg8: memref<128x128xf32, #tpu.memory_space<vmem>>, %arg9: memref<128x128xf32, #tpu.memory_space<vmem>>) attributes {dimension_semantics = [#tpu.dimension_semantics<parallel>, #tpu.dimension_semantics<arbitrary>], iteration_bounds = array<i64: 2, 2>, scalar_prefetch = 0 : i64, scratch_operands = 1 : i64, tpu.core_type = #tpu.core_type<tc>, window_params = [{transform_indices = @transform_0, window_bounds = array<i64: 128, 128>}, {transform_indices = @transform_1, window_bounds = array<i64: 128, 128>}, {pipeline_mode = #tpu.pipeline_mode<synchronous>, transform_indices = @transform_2, window_bounds = array<i64: 128, 128>}, {pipeline_mode = #tpu.pipeline_mode<synchronous>, transform_indices = @transform_3, window_bounds = array<i64: 1, 128>}, {pipeline_mode = #tpu.pipeline_mode<synchronous>, transform_indices = @transform_4, window_bounds = array<i64: 128, 128>}, {pipeline_mode = #tpu.pipeline_mode<synchronous>, transform_indices = @transform_5, window_bounds = array<i64: 1, 128>}, {transform_indices = @transform_6, window_bounds = array<i64: 128, 128>}]} {
    %c0_i32 = arith.constant 0 : i32
    %0 = arith.cmpi eq, %arg1, %c0_i32 : i32
    %1 = arith.extui %0 : i1 to i32
    %c0_i32_0 = arith.constant 0 : i32
    %2 = arith.cmpi ne, %1, %c0_i32_0 : i32
    scf.if %2 {
      %cst_9 = arith.constant 0.000000e+00 : f32
      %12 = vector.broadcast %cst_9 : f32 to vector<128x128xf32>
      %c0_10 = arith.constant 0 : index
      %c0_11 = arith.constant 0 : index
      %13 = vector.load %arg9[%c0_10, %c0_11] : memref<128x128xf32, #tpu.memory_space<vmem>>, vector<128x128xf32>
      tpu.vector_store %arg9[%c0_10, %c0_11], %12 {strides = array<i32>} : memref<128x128xf32, #tpu.memory_space<vmem>>, vector<128x128xf32>,
    } else {
    }
    %c0 = arith.constant 0 : index
    %c0_1 = arith.constant 0 : index
    %3 = vector.load %arg9[%c0, %c0_1] : memref<128x128xf32, #tpu.memory_space<vmem>>, vector<128x128xf32>
    %c0_2 = arith.constant 0 : index
    %c0_3 = arith.constant 0 : index
    %4 = vector.load %arg3[%c0_2, %c0_3] : memref<128x128xf32, #tpu.memory_space<vmem>>, vector<128x128xf32>
    %c0_4 = arith.constant 0 : index
    %c0_5 = arith.constant 0 : index
    %5 = vector.load %arg2[%c0_4, %c0_5] : memref<128x128xf32, #tpu.memory_space<vmem>>, vector<128x128xf32>
    %cst = arith.constant dense<0.000000e+00> : vector<128x128xf32>
    %6 = tpu.matmul %4, %5, %cst {dimension_numbers = #tpu.dot_dimension_numbers<[1], [0], [0], [1], [0, 0, 1, 1], [], []>} : vector<128x128xf32>, vector<128x128xf32>, vector<128x128xf32> -> vector<128x128xf32>
    %7 = arith.addf %3, %6 : vector<128x128xf32>
    %c0_6 = arith.constant 0 : index
    %c0_7 = arith.constant 0 : index
    %8 = vector.load %arg9[%c0_6, %c0_7] : memref<128x128xf32, #tpu.memory_space<vmem>>, vector<128x128xf32>
    tpu.vector_store %arg9[%c0_6, %c0_7], %7 {strides = array<i32>} : memref<128x128xf32, #tpu.memory_space<vmem>>, vector<128x128xf32>,
    %c1_i32 = arith.constant 1 : i32
    %9 = arith.cmpi eq, %arg1, %c1_i32 : i32
    %10 = arith.extui %9 : i1 to i32
    %c0_i32_8 = arith.constant 0 : i32
    %11 = arith.cmpi ne, %10, %c0_i32_8 : i32
    scf.if %11 {
      %c0_9 = arith.constant 0 : index
      %c0_10 = arith.constant 0 : index
      %12 = vector.load %arg9[%c0_9, %c0_10] : memref<128x128xf32, #tpu.memory_space<vmem>>, vector<128x128xf32>
      %c0_11 = arith.constant 0 : index
      %c0_12 = arith.constant 0 : index
      %13 = vector.load %arg4[%c0_11, %c0_12] : memref<128x128xf32, #tpu.memory_space<vmem>>, vector<128x128xf32>
      %cst_13 = arith.constant dense<0.000000e+00> : vector<128x128xf32>
      %14 = tpu.matmul %12, %13, %cst_13 {dimension_numbers = #tpu.dot_dimension_numbers<[1], [0], [0], [1], [0, 0, 1, 1], [], []>} : vector<128x128xf32>, vector<128x128xf32>, vector<128x128xf32> -> vector<128x128xf32>
      %c0_14 = arith.constant 0 : index
      %c0_15 = arith.constant 0 : index
      %15 = vector.load %arg5[%c0_14, %c0_15] : memref<1x128xf32, #tpu.memory_space<vmem>>, vector<1x128xf32>
      %16 = vector.broadcast %15 : vector<1x128xf32> to vector<128x128xf32>
      %17 = arith.addf %14, %16 : vector<128x128xf32>
      %cst_16 = arith.constant 0.000000e+00 : f32
      %18 = vector.broadcast %cst_16 : f32 to vector<128x128xf32>
      %19 = arith.maximumf %17, %18 : vector<128x128xf32>
      %c0_17 = arith.constant 0 : index
      %c0_18 = arith.constant 0 : index
      %20 = vector.load %arg6[%c0_17, %c0_18] : memref<128x128xf32, #tpu.memory_space<vmem>>, vector<128x128xf32>
      %cst_19 = arith.constant dense<0.000000e+00> : vector<128x128xf32>
      %21 = tpu.matmul %19, %20, %cst_19 {dimension_numbers = #tpu.dot_dimension_numbers<[1], [0], [0], [1], [0, 0, 1, 1], [], []>} : vector<128x128xf32>, vector<128x128xf32>, vector<128x128xf32> -> vector<128x128xf32>
      %c0_20 = arith.constant 0 : index
      %c0_21 = arith.constant 0 : index
      %22 = vector.load %arg7[%c0_20, %c0_21] : memref<1x128xf32, #tpu.memory_space<vmem>>, vector<1x128xf32>
      %23 = vector.broadcast %22 : vector<1x128xf32> to vector<128x128xf32>
      %24 = arith.addf %21, %23 : vector<128x128xf32>
      %c0_22 = arith.constant 0 : index
      %c0_23 = arith.constant 0 : index
      %25 = vector.load %arg8[%c0_22, %c0_23] : memref<128x128xf32, #tpu.memory_space<vmem>>, vector<128x128xf32>
      tpu.vector_store %arg8[%c0_22, %c0_23], %24 {strides = array<i32>} : memref<128x128xf32, #tpu.memory_space<vmem>>, vector<128x128xf32>,
    } else {
    }
    return
  }
  func.func @transform_0(%arg0: i32, %arg1: i32) -> (i32, i32) {
    %c0_i32 = arith.constant 0 : i32
    %c0_i32_0 = arith.constant 0 : i32
    return %arg1, %c0_i32 : i32, i32
  }
  func.func @transform_1(%arg0: i32, %arg1: i32) -> (i32, i32) {
    %c0_i32 = arith.constant 0 : i32
    return %arg0, %arg1 : i32, i32
  }
  func.func @transform_2(%arg0: i32, %arg1: i32) -> (i32, i32) {
    %c0_i32 = arith.constant 0 : i32
    %c0_i32_0 = arith.constant 0 : i32
    %c0_i32_1 = arith.constant 0 : i32
    return %c0_i32, %c0_i32_0 : i32, i32
  }
  func.func @transform_3(%arg0: i32, %arg1: i32) -> (i32, i32) {
    %c0_i32 = arith.constant 0 : i32
    %c0_i32_0 = arith.constant 0 : i32
    %c0_i32_1 = arith.constant 0 : i32
    return %c0_i32, %c0_i32_0 : i32, i32
  }
  func.func @transform_4(%arg0: i32, %arg1: i32) -> (i32, i32) {
    %c0_i32 = arith.constant 0 : i32
    %c0_i32_0 = arith.constant 0 : i32
    %c0_i32_1 = arith.constant 0 : i32
    return %c0_i32, %c0_i32_0 : i32, i32
  }
  func.func @transform_5(%arg0: i32, %arg1: i32) -> (i32, i32) {
    %c0_i32 = arith.constant 0 : i32
    %c0_i32_0 = arith.constant 0 : i32
    %c0_i32_1 = arith.constant 0 : i32
    return %c0_i32, %c0_i32_0 : i32, i32
  }
  func.func @transform_6(%arg0: i32, %arg1: i32) -> (i32, i32) {
    %c0_i32 = arith.constant 0 : i32
    %c0_i32_0 = arith.constant 0 : i32
    return %arg0, %c0_i32 : i32, i32
  }
}

</mosaic_0001>

<llo_original>
// kernel: gnn_classifier_forward.1
$region0: #{gnn_classifier_forward.1}
  #allocation0 [shape = 'u32[]', space=smem, size = 0x4, offset = 0x4, fixed_abs, tag = 'smem constant byte address 0x4 - core index']
  #allocation1 [shape = 'u32[72,128]{1,0:T(1,128)}', space=vmem, size = 0x9000, scoped, tag = 'internal scratch']
  #allocation2 [shape = 'f32[128,128]{1,0:T(8,128)}', space=vmem, size = 0x10000, scoped, tag = 'scratch operand']
  %s0 = inlined_call_operand.vmem [shape: f32[256,128], index: 0, kind: input, shape index: {}]
  %s1 = inlined_call_operand.vmem [shape: f32[256,256], index: 1, kind: input, shape index: {}]
  %s2 = inlined_call_operand.vmem [shape: f32[128,128], index: 2, kind: input, shape index: {}]
  %s3 = inlined_call_operand.vmem [shape: f32[1,128], index: 3, kind: input, shape index: {}]
  %s4 = inlined_call_operand.vmem [shape: f32[128,128], index: 4, kind: input, shape index: {}]
  %s5 = inlined_call_operand.vmem [shape: f32[1,128], index: 5, kind: input, shape index: {}]
  %s6 = inlined_call_operand.vmem [shape: f32[256,128], index: 6, kind: output, shape index: {}]
  %s7 = sld [smem:[#allocation0]]
  $region103: #{gnn_classifier_forward.1} parent=0
    _
  %s9 = ssub.s32 1, %s7
  %s10 = scalar_select 0, %s9, %s7
  $region1: #{gnn_classifier_forward.1} parent=0
    #allocation3 [shape = 'u8[131072]{0}', space=vmem, size = 0x20000, scoped, tag = 'input window, operand 1']
    loop: start=0, step=1, limit=6
    $region2: #{gnn_classifier_forward.1} parent=1 // loop_pre_header
      _
    $region3: #{gnn_classifier_forward.1} parent=1 // loop_header
      %s12 = sphi 0, %s16
      %p13 = scmp.ge.s32.totalorder %s12, 6
      %s19 = sphi 0, %s31
      %s20 = sphi 0, %s27
      %s21 = sphi 0, %s19
      %s22 = sphi 0, %s20
      %s23 = sphi 0, %s21
      %s24 = sphi 0, %s22
      %s34 = sphi 0, %s36
      %s37 = sphi 0, %s34
      %s38 = sphi 0, %s37
      %s54 = sphi 0, %s38
      %s62 = sphi 0, %s64
      %s65 = sphi 0, %s62
      %s66 = sphi 0, %s65
      %s82 = sphi 0, %s66
      %s86 = sphi 0, %s86
      %s88 = sphi 0, %s86
      %s89 = sphi 0, %s88
      %s103 = sphi 0, %s89
      %s107 = sphi 0, %s107
      %s109 = sphi 0, %s107
      %s110 = sphi 0, %s109
      %s124 = sphi 0, %s110
      %s128 = sphi 0, %s128
      %s130 = sphi 0, %s128
      %s131 = sphi 0, %s130
      %s145 = sphi 0, %s131
      %s149 = sphi 0, %s149
      %s151 = sphi 0, %s149
      %s152 = sphi 0, %s151
      %s166 = sphi 0, %s152
      %s172 = sphi 0, %s174
      %s175 = sphi 0, %s172
      %s176 = sphi 0, %s175
      %s192 = sphi 0, %s176
    $region4: #{gnn_classifier_forward.1} parent=1 // loop_header_branch
      %15 = sbr.rel (%p13) target = $region8
    $region5: #{gnn_classifier_forward.1} parent=1 // loop_body
      %s17 = ssub.s32 %s12, 1
      %s18 = ssub.s32 %s12, 2
      %s25 = sadd.s32 1, %s20
      %p26 = scmp.ge.s32.totalorder %s25, 2
      %s27 = scalar_select %p26, 0, %s25
      %s28 = sadd.s32 1, %s19
      %s29 = scalar_select %p26, %s28, %s19
      %p30 = scmp.ge.s32.totalorder %s29, 2
      %s31 = scalar_select %p30, 0, %s29
      %s32 = ssub.s32 %s20, %s27
      %p33 = scmp.eq.s32.totalorder %s32, 0
      %s35 = sadd.s32 %s34, 1
      %s36 = scalar_select %p33, %s34, %s35
      %p39 = pneg %p33
      %p40 = scmp.eq.s32.totalorder %s12, 3
      %p41 = por %p39, %p40
      %p42 = scmp.ne.s32.totalorder %s34, %s37
      %p43 = scmp.eq.s32.totalorder %s12, 0
      %p44 = por %p42, %p43
      %p45 = scmp.ne.s32.totalorder %s34, %s37
      %p46 = scmp.eq.s32.totalorder %s17, 3
      %p47 = por %p45, %p46
      %p48 = scmp.ne.s32.totalorder %s37, %s38
      %p49 = scmp.eq.s32.totalorder %s17, 0
      %p50 = por %p48, %p49
      %p51 = scmp.ne.s32.totalorder %s37, %s38
      %p52 = scmp.eq.s32.totalorder %s18, 3
      %p53 = por %p51, %p52
      %p55 = scmp.ne.s32.totalorder %s38, %s54
      %p56 = scmp.eq.s32.totalorder %s18, 0
      %p57 = por %p55, %p56
      %s58 = ssub.s32 %s19, %s31
      %s59 = ssub.s32 %s20, %s27
      %s60 = sor.u32 %s58, %s59
      %p61 = scmp.eq.s32.totalorder %s60, 0
      %s63 = sadd.s32 %s62, 1
      %s64 = scalar_select %p61, %s62, %s63
      %p67 = pneg %p61
      %p68 = scmp.eq.s32.totalorder %s12, 3
      %p69 = por %p67, %p68
      %p70 = scmp.ne.s32.totalorder %s62, %s65
      %p71 = scmp.eq.s32.totalorder %s12, 0
      %p72 = por %p70, %p71
      %p73 = scmp.ne.s32.totalorder %s62, %s65
      %p74 = scmp.eq.s32.totalorder %s17, 3
      %p75 = por %p73, %p74
      %p76 = scmp.ne.s32.totalorder %s65, %s66
      %p77 = scmp.eq.s32.totalorder %s17, 0
      %p78 = por %p76, %p77
      %p79 = scmp.ne.s32.totalorder %s65, %s66
      %p80 = scmp.eq.s32.totalorder %s18, 3
      %p81 = por %p79, %p80
      %p83 = scmp.ne.s32.totalorder %s66, %s82
      %p84 = scmp.eq.s32.totalorder %s18, 0
      %p85 = por %p83, %p84
      %s87 = sadd.s32 %s86, 1
      %p90 = scmp.eq.s32.totalorder %s12, 3
      %p91 = scmp.ne.s32.totalorder %s86, %s88
      %p92 = scmp.eq.s32.totalorder %s12, 0
      %p93 = por %p91, %p92
      %p94 = scmp.ne.s32.totalorder %s86, %s88
      %p95 = scmp.eq.s32.totalorder %s17, 3
      %p96 = por %p94, %p95
      %p97 = scmp.ne.s32.totalorder %s88, %s89
      %p98 = scmp.eq.s32.totalorder %s17, 0
      %p99 = por %p97, %p98
      %p100 = scmp.ne.s32.totalorder %s88, %s89
      %p101 = scmp.eq.s32.totalorder %s18, 3
      %p102 = por %p100, %p101
      %p104 = scmp.ne.s32.totalorder %s89, %s103
      %p105 = scmp.eq.s32.totalorder %s18, 0
      %p106 = por %p104, %p105
      %s108 = sadd.s32 %s107, 1
      %p111 = scmp.eq.s32.totalorder %s12, 3
      %p112 = scmp.ne.s32.totalorder %s107, %s109
      %p113 = scmp.eq.s32.totalorder %s12, 0
      %p114 = por %p112, %p113
      %p115 = scmp.ne.s32.totalorder %s107, %s109
      %p116 = scmp.eq.s32.totalorder %s17, 3
      %p117 = por %p115, %p116
      %p118 = scmp.ne.s32.totalorder %s109, %s110
      %p119 = scmp.eq.s32.totalorder %s17, 0
      %p120 = por %p118, %p119
      %p121 = scmp.ne.s32.totalorder %s109, %s110
      %p122 = scmp.eq.s32.totalorder %s18, 3
      %p123 = por %p121, %p122
      %p125 = scmp.ne.s32.totalorder %s110, %s124
      %p126 = scmp.eq.s32.totalorder %s18, 0
      %p127 = por %p125, %p126
      %s129 = sadd.s32 %s128, 1
      %p132 = scmp.eq.s32.totalorder %s12, 3
      %p133 = scmp.ne.s32.totalorder %s128, %s130
      %p134 = scmp.eq.s32.totalorder %s12, 0
      %p135 = por %p133, %p134
      %p136 = scmp.ne.s32.totalorder %s128, %s130
      %p137 = scmp.eq.s32.totalorder %s17, 3
      %p138 = por %p136, %p137
      %p139 = scmp.ne.s32.totalorder %s130, %s131
      %p140 = scmp.eq.s32.totalorder %s17, 0
      %p141 = por %p139, %p140
      %p142 = scmp.ne.s32.totalorder %s130, %s131
      %p143 = scmp.eq.s32.totalorder %s18, 3
      %p144 = por %p142, %p143
      %p146 = scmp.ne.s32.totalorder %s131, %s145
      %p147 = scmp.eq.s32.totalorder %s18, 0
      %p148 = por %p146, %p147
      %s150 = sadd.s32 %s149, 1
      %p153 = scmp.eq.s32.totalorder %s12, 3
      %p154 = scmp.ne.s32.totalorder %s149, %s151
      %p155 = scmp.eq.s32.totalorder %s12, 0
      %p156 = por %p154, %p155
      %p157 = scmp.ne.s32.totalorder %s149, %s151
      %p158 = scmp.eq.s32.totalorder %s17, 3
      %p159 = por %p157, %p158
      %p160 = scmp.ne.s32.totalorder %s151, %s152
      %p161 = scmp.eq.s32.totalorder %s17, 0
      %p162 = por %p160, %p161
      %p163 = scmp.ne.s32.totalorder %s151, %s152
      %p164 = scmp.eq.s32.totalorder %s18, 3
      %p165 = por %p163, %p164
      %p167 = scmp.ne.s32.totalorder %s152, %s166
      %p168 = scmp.eq.s32.totalorder %s18, 0
      %p169 = por %p167, %p168
      %s170 = ssub.s32 %s19, %s31
      %p171 = scmp.eq.s32.totalorder %s170, 0
      %s173 = sadd.s32 %s172, 1
      %s174 = scalar_select %p171, %s172, %s173
      %p177 = pneg %p171
      %p178 = scmp.eq.s32.totalorder %s12, 3
      %p179 = por %p177, %p178
      %p180 = scmp.ne.s32.totalorder %s172, %s175
      %p181 = scmp.eq.s32.totalorder %s12, 0
      %p182 = por %p180, %p181
      %p183 = scmp.ne.s32.totalorder %s172, %s175
      %p184 = scmp.eq.s32.totalorder %s17, 3
      %p185 = por %p183, %p184
      %p186 = scmp.ne.s32.totalorder %s175, %s176
      %p187 = scmp.eq.s32.totalorder %s17, 0
      %p188 = por %p186, %p187
      %p189 = scmp.ne.s32.totalorder %s175, %s176
      %p190 = scmp.eq.s32.totalorder %s18, 3
      %p191 = por %p189, %p190
      %p193 = scmp.ne.s32.totalorder %s176, %s192
      %p194 = scmp.eq.s32.totalorder %s18, 0
      %p195 = por %p193, %p194
      %p196 = scmp.le.s32.totalorder 1, %s12
      %p197 = scmp.lt.s32.totalorder %s12, 5
      %p198 = pnand %p196, %p197
      %p199 = pneg %p198
      // Predicated region
      $region9: #{gnn_classifier_forward.1} parent=5 // pred_check
        _
      $region10: #{gnn_classifier_forward.1} parent=5 // pred_check_branch
        %201 = sbr.rel (%p198) target = $region12
      $region11: #{gnn_classifier_forward.1} parent=5 // pred_region
        %s202 = ssub.s32 %s12, 1
        // Predicated region
        $region13: #{gnn_classifier_forward.1} parent=11 // pred_check
          %p203 = pneg %p99
        $region14: #{gnn_classifier_forward.1} parent=11 // pred_check_branch
          %205 = sbr.rel (%p203) target = $region16
        $region15: #{gnn_classifier_forward.1} parent=11 // pred_region
          _
        $region16: #{gnn_classifier_forward.1} parent=11 // pred_fallthru
          _
        // Predicated region
        $region17: #{gnn_classifier_forward.1} parent=11 // pred_check
          %p206 = pneg %p120
        $region18: #{gnn_classifier_forward.1} parent=11 // pred_check_branch
          %208 = sbr.rel (%p206) target = $region20
        $region19: #{gnn_classifier_forward.1} parent=11 // pred_region
          _
        $region20: #{gnn_classifier_forward.1} parent=11 // pred_fallthru
          _
        // Predicated region
        $region21: #{gnn_classifier_forward.1} parent=11 // pred_check
          %p209 = pneg %p141
        $region22: #{gnn_classifier_forward.1} parent=11 // pred_check_branch
          %211 = sbr.rel (%p209) target = $region24
        $region23: #{gnn_classifier_forward.1} parent=11 // pred_region
          _
        $region24: #{gnn_classifier_forward.1} parent=11 // pred_fallthru
          _
        // Predicated region
        $region25: #{gnn_classifier_forward.1} parent=11 // pred_check
          %p212 = pneg %p162
        $region26: #{gnn_classifier_forward.1} parent=11 // pred_check_branch
          %214 = sbr.rel (%p212) target = $region28
        $region27: #{gnn_classifier_forward.1} parent=11 // pred_region
          _
        $region28: #{gnn_classifier_forward.1} parent=11 // pred_fallthru
          _
      $region12: #{gnn_classifier_forward.1} parent=5 // pred_fallthru
        _
      %p215 = scmp.lt.s32.totalorder %s12, 4
      // Predicated region
      $region29: #{gnn_classifier_forward.1} parent=5 // pred_check
        %p216 = pneg %p215
      $region30: #{gnn_classifier_forward.1} parent=5 // pred_check_branch
        %218 = sbr.rel (%p216) target = $region32
      $region31: #{gnn_classifier_forward.1} parent=5 // pred_region
        // Predicated region
        $region33: #{gnn_classifier_forward.1} parent=31 // pred_check
          %p219 = pneg %p44
        $region34: #{gnn_classifier_forward.1} parent=31 // pred_check_branch
          %221 = sbr.rel (%p219) target = $region36
        $region35: #{gnn_classifier_forward.1} parent=31 // pred_region
          %s222 = smul.u32 16, %s20
          %p223 = scmp.lt.s32.totalorder %s222, 31
          %s224 = scalar_select %p223, %s222, 31
          %s225 = smul.addr %s224, 8
          %s226 = scalar_lea.vmem %s0, %s225
          %s227 = smul.u32 16, %s20
        $region36: #{gnn_classifier_forward.1} parent=31 // pred_fallthru
          _
        // Predicated region
        $region37: #{gnn_classifier_forward.1} parent=31 // pred_check
          %p228 = pneg %p72
        $region38: #{gnn_classifier_forward.1} parent=31 // pred_check_branch
          %230 = sbr.rel (%p228) target = $region40
        $region39: #{gnn_classifier_forward.1} parent=31 // pred_region
          %s231 = sand.u32 %s62, 1
          %s232 = sand.u32 %s62, 1
          %s233 = smul.addr %s232, 128
          %s234 = scalar_lea.vmem [#allocation3], %s233
          %s235 = smul.u32 16, %s19
          %s236 = smul.addr %s235, 2
          %s237 = sadd.s32 %s20, %s236
          %s238 = smul.addr %s237, 8
          %s239 = scalar_lea.vmem %s1, %s238
          // Predicated region
          $region41: #{gnn_classifier_forward.1} parent=39 // pred_check
            _
          $region42: #{gnn_classifier_forward.1} parent=39 // pred_check_branch
            %241 = sbr.rel (0) target = $region44
          $region43: #{gnn_classifier_forward.1} parent=39 // pred_region
            // Predicated region
            $region45: #{gnn_classifier_forward.1} parent=43 // pred_check
              _
            $region46: #{gnn_classifier_forward.1} parent=43 // pred_check_branch
              %243 = sbr.rel (0) target = $region48
            $region47: #{gnn_classifier_forward.1} parent=43 // pred_region
              // Predicated region
              $region60: #{gnn_classifier_forward.1} parent=47 // pred_check
                _
              $region61: #{gnn_classifier_forward.1} parent=47 // pred_check_branch
                %289 = sbr.rel (0) target = $region63
              $region62: #{gnn_classifier_forward.1} parent=47 // pred_region
                loop: start=0, step=1, limit=1
                $region64: #{gnn_classifier_forward.1} parent=62 // loop_pre_header
                  _
                $region65: #{gnn_classifier_forward.1} parent=62 // loop_header
                  %s291 = sphi 0, %s295
                  %p292 = scmp.ge.s32.totalorder %s291, 1
                  %s296 = sphi %s239, %s239
                  %s297 = sphi %s234, %s234
                $region66: #{gnn_classifier_forward.1} parent=62 // loop_header_branch
                  %294 = sbr.rel (%p292) target = $region70
                $region67: #{gnn_classifier_forward.1} parent=62 // loop_body
                  %v298 = vld [vmem:[%s296] sm:$0xff]
                  %299 = vst [vmem:[%s297] sm:$0xff] %v298
                  %v300 = vld [vmem:[%s296 + $0x10] sm:$0xff]
                  %301 = vst [vmem:[%s297 + $0x8] sm:$0xff] %v300
                  %v302 = vld [vmem:[%s296 + $0x20] sm:$0xff]
                  %303 = vst [vmem:[%s297 + $0x10] sm:$0xff] %v302
                  %v304 = vld [vmem:[%s296 + $0x30] sm:$0xff]
                  %305 = vst [vmem:[%s297 + $0x18] sm:$0xff] %v304
                  %v306 = vld [vmem:[%s296 + $0x40] sm:$0xff]
                  %307 = vst [vmem:[%s297 + $0x20] sm:$0xff] %v306
                  %v308 = vld [vmem:[%s296 + $0x50] sm:$0xff]
                  %309 = vst [vmem:[%s297 + $0x28] sm:$0xff] %v308
                  %v310 = vld [vmem:[%s296 + $0x60] sm:$0xff]
                  %311 = vst [vmem:[%s297 + $0x30] sm:$0xff] %v310
                  %v312 = vld [vmem:[%s296 + $0x70] sm:$0xff]
                  %313 = vst [vmem:[%s297 + $0x38] sm:$0xff] %v312
                  %v314 = vld [vmem:[%s296 + $0x80] sm:$0xff]
                  %315 = vst [vmem:[%s297 + $0x40] sm:$0xff] %v314
                  %v316 = vld [vmem:[%s296 + $0x90] sm:$0xff]
                  %317 = vst [vmem:[%s297 + $0x48] sm:$0xff] %v316
                  %v318 = vld [vmem:[%s296 + $0xa0] sm:$0xff]
                  %319 = vst [vmem:[%s297 + $0x50] sm:$0xff] %v318
                  %v320 = vld [vmem:[%s296 + $0xb0] sm:$0xff]
                  %321 = vst [vmem:[%s297 + $0x58] sm:$0xff] %v320
                  %v322 = vld [vmem:[%s296 + $0xc0] sm:$0xff]
                  %323 = vst [vmem:[%s297 + $0x60] sm:$0xff] %v322
                  %v324 = vld [vmem:[%s296 + $0xd0] sm:$0xff]
                  %325 = vst [vmem:[%s297 + $0x68] sm:$0xff] %v324
                  %v326 = vld [vmem:[%s296 + $0xe0] sm:$0xff]
                  %327 = vst [vmem:[%s297 + $0x70] sm:$0xff] %v326
                  %v328 = vld [vmem:[%s296 + $0xf0] sm:$0xff]
                  %329 = vst [vmem:[%s297 + $0x78] sm:$0xff] %v328
                $region68: #{gnn_classifier_forward.1} parent=62 // loop_footer
                  %s295 = sadd.s32 1, %s291
                $region69: #{gnn_classifier_forward.1} parent=62 // loop_footer_branch
                  %290 = sbr.rel target = $region65
                $region70: #{gnn_classifier_forward.1} parent=62 // loop_exit
                  _
              $region63: #{gnn_classifier_forward.1} parent=47 // pred_fallthru
                _
              // Predicated region
              $region71: #{gnn_classifier_forward.1} parent=47 // pred_check
                _
              $region72: #{gnn_classifier_forward.1} parent=47 // pred_check_branch
                %331 = sbr.rel target = $region74
              $region73: #{gnn_classifier_forward.1} parent=47 // pred_region
                _
              $region74: #{gnn_classifier_forward.1} parent=47 // pred_fallthru
                _
            $region48: #{gnn_classifier_forward.1} parent=43 // pred_fallthru
              _
            // Predicated region
            $region49: #{gnn_classifier_forward.1} parent=43 // pred_check
              _
            $region50: #{gnn_classifier_forward.1} parent=43 // pred_check_branch
              %245 = sbr.rel target = $region52
            $region51: #{gnn_classifier_forward.1} parent=43 // pred_region
              %s247 = ssub.s32 256, 1
              loop: start=0, step=1, limit=1
              $region53: #{gnn_classifier_forward.1} parent=51 // loop_pre_header
                _
              $region54: #{gnn_classifier_forward.1} parent=51 // loop_header
                %s249 = sphi 0, %s253
                %p250 = scmp.ge.s32.totalorder %s249, 1
                %s254 = sphi %s239, %s239
                %s255 = sphi %s234, %s234
              $region55: #{gnn_classifier_forward.1} parent=51 // loop_header_branch
                %252 = sbr.rel (%p250) target = $region59
              $region56: #{gnn_classifier_forward.1} parent=51 // loop_body
                %v256 = vld [vmem:[%s254] sm:%s247]
                %257 = vst [vmem:[%s255] sm:%s247] %v256
                %v258 = vld [vmem:[%s254 + $0x10] sm:%s247]
                %259 = vst [vmem:[%s255 + $0x8] sm:%s247] %v258
                %v260 = vld [vmem:[%s254 + $0x20] sm:%s247]
                %261 = vst [vmem:[%s255 + $0x10] sm:%s247] %v260
                %v262 = vld [vmem:[%s254 + $0x30] sm:%s247]
                %263 = vst [vmem:[%s255 + $0x18] sm:%s247] %v262
                %v264 = vld [vmem:[%s254 + $0x40] sm:%s247]
                %265 = vst [vmem:[%s255 + $0x20] sm:%s247] %v264
                %v266 = vld [vmem:[%s254 + $0x50] sm:%s247]
                %267 = vst [vmem:[%s255 + $0x28] sm:%s247] %v266
                %v268 = vld [vmem:[%s254 + $0x60] sm:%s247]
                %269 = vst [vmem:[%s255 + $0x30] sm:%s247] %v268
                %v270 = vld [vmem:[%s254 + $0x70] sm:%s247]
                %271 = vst [vmem:[%s255 + $0x38] sm:%s247] %v270
                %v272 = vld [vmem:[%s254 + $0x80] sm:%s247]
                %273 = vst [vmem:[%s255 + $0x40] sm:%s247] %v272
                %v274 = vld [vmem:[%s254 + $0x90] sm:%s247]
                %275 = vst [vmem:[%s255 + $0x48] sm:%s247] %v274
                %v276 = vld [vmem:[%s254 + $0xa0] sm:%s247]
                %277 = vst [vmem:[%s255 + $0x50] sm:%s247] %v276
                %v278 = vld [vmem:[%s254 + $0xb0] sm:%s247]
                %279 = vst [vmem:[%s255 + $0x58] sm:%s247] %v278
                %v280 = vld [vmem:[%s254 + $0xc0] sm:%s247]
                %281 = vst [vmem:[%s255 + $0x60] sm:%s247] %v280
                %v282 = vld [vmem:[%s254 + $0xd0] sm:%s247]
                %283 = vst [vmem:[%s255 + $0x68] sm:%s247] %v282
                %v284 = vld [vmem:[%s254 + $0xe0] sm:%s247]
                %285 = vst [vmem:[%s255 + $0x70] sm:%s247] %v284
                %v286 = vld [vmem:[%s254 + $0xf0] sm:%s247]
                %287 = vst [vmem:[%s255 + $0x78] sm:%s247] %v286
              $region57: #{gnn_classifier_forward.1} parent=51 // loop_footer
                %s253 = sadd.s32 1, %s249
              $region58: #{gnn_classifier_forward.1} parent=51 // loop_footer_branch
                %248 = sbr.rel target = $region54
              $region59: #{gnn_classifier_forward.1} parent=51 // loop_exit
                _
            $region52: #{gnn_classifier_forward.1} parent=43 // pred_fallthru
              _
          $region44: #{gnn_classifier_forward.1} parent=39 // pred_fallthru
            _
          %332 = vnop
        $region40: #{gnn_classifier_forward.1} parent=31 // pred_fallthru
          _
      $region32: #{gnn_classifier_forward.1} parent=5 // pred_fallthru
        _
      %p333 = scmp.le.s32.totalorder 1, %s12
      %p334 = scmp.lt.s32.totalorder %s12, 5
      %p335 = pnand %p333, %p334
      %p336 = pneg %p335
      // Predicated region
      $region75: #{gnn_classifier_forward.1} parent=5 // pred_check
        _
      $region76: #{gnn_classifier_forward.1} parent=5 // pred_check_branch
        %338 = sbr.rel (%p335) target = $region78
      $region77: #{gnn_classifier_forward.1} parent=5 // pred_region
        %s339 = ssub.s32 %s12, 1
        %s340 = sand.u32 %s65, 1
        %s341 = sand.u32 %s65, 1
        %s342 = smul.addr %s341, 128
        %s343 = scalar_lea.vmem [#allocation3], %s342
        // Predicated region
        $region79: #{gnn_classifier_forward.1} parent=77 // pred_check
          %p344 = pneg %p78
        $region80: #{gnn_classifier_forward.1} parent=77 // pred_check_branch
          %346 = sbr.rel (%p344) target = $region82
        $region81: #{gnn_classifier_forward.1} parent=77 // pred_region
          _
        $region82: #{gnn_classifier_forward.1} parent=77 // pred_fallthru
          _
        %s347 = smul.u32 16, %s22
        %p348 = scmp.lt.s32.totalorder %s347, 31
        %s349 = scalar_select %p348, %s347, 31
        %s350 = smul.addr %s349, 8
        %s351 = scalar_lea.vmem %s0, %s350
        %p352 = pneg %p50
        %p353 = pneg %p47
        %s354 = sand.u32 %s65, 1
        %s355 = sand.u32 %s65, 1
        %s356 = smul.addr %s355, 128
        %s357 = scalar_lea.vmem [#allocation3], %s356
        %p358 = pneg %p78
        %p359 = pneg %p75
        %p360 = pneg %p99
        %p361 = pneg %p96
        %p362 = pneg %p120
        %p363 = pneg %p117
        %p364 = pneg %p141
        %p365 = pneg %p138
        %p366 = pneg %p162
        %p367 = pneg %p159
        %p368 = pneg %p188
        %p369 = pneg %p185
        %s370 = smul.u32 16, %s21
        %p371 = scmp.lt.s32.totalorder %s370, 31
        %s372 = scalar_select %p371, %s370, 31
        %s373 = smul.addr %s372, 8
        %s374 = scalar_lea.vmem %s6, %s373
        %s375 = smul.u32 16, %s22
        %p376 = scmp.lt.s32.totalorder %s375, 31
        %s377 = scalar_select %p376, %s375, 31
        %s378 = smul.addr %s377, 8
        %s379 = scalar_lea.vmem %s0, %s378
        %s380 = smul.u32 16, %s22
        %s381 = smul.u32 16, %s21
        %s382 = smul.u32 16, %s21
        %p383 = scmp.lt.s32.totalorder %s382, 31
        %s384 = scalar_select %p383, %s382, 31
        %s385 = smul.addr %s384, 8
        %s386 = scalar_lea.vmem %s6, %s385
        %s387 = smul.u32 16, %s21
        %p388 = scmp.eq.s32.totalorder %s22, 0
        // Predicated region
        $region83: #{gnn_classifier_forward.1} parent=77 // pred_check
          %p389 = pneg %p388
        $region84: #{gnn_classifier_forward.1} parent=77 // pred_check_branch
          %391 = sbr.rel (%p389) target = $region86
        $region85: #{gnn_classifier_forward.1} parent=77 // pred_region
          %392 = vst [vmem:[#allocation2] sm:$0xff] 0.0
          %393 = vst [vmem:[#allocation2 + $0x8] sm:$0xff] 0.0
          %394 = vst [vmem:[#allocation2 + $0x10] sm:$0xff] 0.0
          %395 = vst [vmem:[#allocation2 + $0x18] sm:$0xff] 0.0
          %396 = vst [vmem:[#allocation2 + $0x20] sm:$0xff] 0.0
          %397 = vst [vmem:[#allocation2 + $0x28] sm:$0xff] 0.0
          %398 = vst [vmem:[#allocation2 + $0x30] sm:$0xff] 0.0
          %399 = vst [vmem:[#allocation2 + $0x38] sm:$0xff] 0.0
          %400 = vst [vmem:[#allocation2 + $0x40] sm:$0xff] 0.0
          %401 = vst [vmem:[#allocation2 + $0x48] sm:$0xff] 0.0
          %402 = vst [vmem:[#allocation2 + $0x50] sm:$0xff] 0.0
          %403 = vst [vmem:[#allocation2 + $0x58] sm:$0xff] 0.0
          %404 = vst [vmem:[#allocation2 + $0x60] sm:$0xff] 0.0
          %405 = vst [vmem:[#allocation2 + $0x68] sm:$0xff] 0.0
          %406 = vst [vmem:[#allocation2 + $0x70] sm:$0xff] 0.0
          %407 = vst [vmem:[#allocation2 + $0x78] sm:$0xff] 0.0
        $region86: #{gnn_classifier_forward.1} parent=77 // pred_fallthru
          _
        %v408 = vld [vmem:[#allocation2] sm:$0xff]
        %v409 = vld [vmem:[#allocation2 + $0x8] sm:$0xff]
        %v410 = vld [vmem:[#allocation2 + $0x10] sm:$0xff]
        %v411 = vld [vmem:[#allocation2 + $0x18] sm:$0xff]
        %v412 = vld [vmem:[#allocation2 + $0x20] sm:$0xff]
        %v413 = vld [vmem:[#allocation2 + $0x28] sm:$0xff]
        %v414 = vld [vmem:[#allocation2 + $0x30] sm:$0xff]
        %v415 = vld [vmem:[#allocation2 + $0x38] sm:$0xff]
        %v416 = vld [vmem:[#allocation2 + $0x40] sm:$0xff]
        %v417 = vld [vmem:[#allocation2 + $0x48] sm:$0xff]
        %v418 = vld [vmem:[#allocation2 + $0x50] sm:$0xff]
        %v419 = vld [vmem:[#allocation2 + $0x58] sm:$0xff]
        %v420 = vld [vmem:[#allocation2 + $0x60] sm:$0xff]
        %v421 = vld [vmem:[#allocation2 + $0x68] sm:$0xff]
        %v422 = vld [vmem:[#allocation2 + $0x70] sm:$0xff]
        %v423 = vld [vmem:[#allocation2 + $0x78] sm:$0xff]
        %v424 = vld [vmem:[%s343] sm:$0xff]
        %v425 = vld [vmem:[%s343 + $0x8] sm:$0xff]
        %v426 = vld [vmem:[%s343 + $0x10] sm:$0xff]
        %v427 = vld [vmem:[%s343 + $0x18] sm:$0xff]
        %v428 = vld [vmem:[%s343 + $0x20] sm:$0xff]
        %v429 = vld [vmem:[%s343 + $0x28] sm:$0xff]
        %v430 = vld [vmem:[%s343 + $0x30] sm:$0xff]
        %v431 = vld [vmem:[%s343 + $0x38] sm:$0xff]
        %v432 = vld [vmem:[%s343 + $0x40] sm:$0xff]
        %v433 = vld [vmem:[%s343 + $0x48] sm:$0xff]
        %v434 = vld [vmem:[%s343 + $0x50] sm:$0xff]
        %v435 = vld [vmem:[%s343 + $0x58] sm:$0xff]
        %v436 = vld [vmem:[%s343 + $0x60] sm:$0xff]
        %v437 = vld [vmem:[%s343 + $0x68] sm:$0xff]
        %v438 = vld [vmem:[%s343 + $0x70] sm:$0xff]
        %v439 = vld [vmem:[%s343 + $0x78] sm:$0xff]
        %v440 = vld [vmem:[%s379] sm:$0xff]
        %v441 = vld [vmem:[%s379 + $0x8] sm:$0xff]
        %v442 = vld [vmem:[%s379 + $0x10] sm:$0xff]
        %v443 = vld [vmem:[%s379 + $0x18] sm:$0xff]
        %v444 = vld [vmem:[%s379 + $0x20] sm:$0xff]
        %v445 = vld [vmem:[%s379 + $0x28] sm:$0xff]
        %v446 = vld [vmem:[%s379 + $0x30] sm:$0xff]
        %v447 = vld [vmem:[%s379 + $0x38] sm:$0xff]
        %v448 = vld [vmem:[%s379 + $0x40] sm:$0xff]
        %v449 = vld [vmem:[%s379 + $0x48] sm:$0xff]
        %v450 = vld [vmem:[%s379 + $0x50] sm:$0xff]
        %v451 = vld [vmem:[%s379 + $0x58] sm:$0xff]
        %v452 = vld [vmem:[%s379 + $0x60] sm:$0xff]
        %v453 = vld [vmem:[%s379 + $0x68] sm:$0xff]
        %v454 = vld [vmem:[%s379 + $0x70] sm:$0xff]
        %v455 = vld [vmem:[%s379 + $0x78] sm:$0xff]
        %456 = vmatpush.msra.mxu0 %v455
        %457 = vmatpush.msra.mxu0 %v454
        %458 = vmatpush.msra.mxu0 %v453
        %459 = vmatpush.msra.mxu0 %v452
        %460 = vmatpush.msra.mxu0 %v451
        %461 = vmatpush.msra.mxu0 %v450
        %462 = vmatpush.msra.mxu0 %v449
        %463 = vmatpush.msra.mxu0 %v448
        %464 = vmatpush.msra.mxu0 %v447
        %465 = vmatpush.msra.mxu0 %v446
        %466 = vmatpush.msra.mxu0 %v445
        %467 = vmatpush.msra.mxu0 %v444
        %468 = vmatpush.msra.mxu0 %v443
        %469 = vmatpush.msra.mxu0 %v442
        %470 = vmatpush.msra.mxu0 %v441
        %471 = vmatpush.msra.mxu0 %v440
        %472 = vmatmul.f32.gmra.mxu0 %v424
        %v473 = vpop.f32.mrf.mxu0
        %v474 = vadd.f32 0.0, %v473
        %475 = vmatmul.f32.gmra.mxu0 %v425
        %v476 = vpop.f32.mrf.mxu0
        %v477 = vadd.f32 0.0, %v476
        %478 = vmatmul.f32.gmra.mxu0 %v426
        %v479 = vpop.f32.mrf.mxu0
        %v480 = vadd.f32 0.0, %v479
        %481 = vmatmul.f32.gmra.mxu0 %v427
        %v482 = vpop.f32.mrf.mxu0
        %v483 = vadd.f32 0.0, %v482
        %484 = vmatmul.f32.gmra.mxu0 %v428
        %v485 = vpop.f32.mrf.mxu0
        %v486 = vadd.f32 0.0, %v485
        %487 = vmatmul.f32.gmra.mxu0 %v429
        %v488 = vpop.f32.mrf.mxu0
        %v489 = vadd.f32 0.0, %v488
        %490 = vmatmul.f32.gmra.mxu0 %v430
        %v491 = vpop.f32.mrf.mxu0
        %v492 = vadd.f32 0.0, %v491
        %493 = vmatmul.f32.gmra.mxu0 %v431
        %v494 = vpop.f32.mrf.mxu0
        %v495 = vadd.f32 0.0, %v494
        %496 = vmatmul.f32.gmra.mxu0 %v432
        %v497 = vpop.f32.mrf.mxu0
        %v498 = vadd.f32 0.0, %v497
        %499 = vmatmul.f32.gmra.mxu0 %v433
        %v500 = vpop.f32.mrf.mxu0
        %v501 = vadd.f32 0.0, %v500
        %502 = vmatmul.f32.gmra.mxu0 %v434
        %v503 = vpop.f32.mrf.mxu0
        %v504 = vadd.f32 0.0, %v503
        %505 = vmatmul.f32.gmra.mxu0 %v435
        %v506 = vpop.f32.mrf.mxu0
        %v507 = vadd.f32 0.0, %v506
        %508 = vmatmul.f32.gmra.mxu0 %v436
        %v509 = vpop.f32.mrf.mxu0
        %v510 = vadd.f32 0.0, %v509
        %511 = vmatmul.f32.gmra.mxu0 %v437
        %v512 = vpop.f32.mrf.mxu0
        %v513 = vadd.f32 0.0, %v512
        %514 = vmatmul.f32.gmra.mxu0 %v438
        %v515 = vpop.f32.mrf.mxu0
        %v516 = vadd.f32 0.0, %v515
        %517 = vmatmul.f32.gmra.mxu0 %v439
        %v518 = vpop.f32.mrf.mxu0
        %v519 = vadd.f32 0.0, %v518
        %520 = vdwg.mxu0
        %v521 = vadd.f32 %v408, %v474
        %v522 = vadd.f32 %v409, %v477
        %v523 = vadd.f32 %v410, %v480
        %v524 = vadd.f32 %v411, %v483
        %v525 = vadd.f32 %v412, %v486
        %v526 = vadd.f32 %v413, %v489
        %v527 = vadd.f32 %v414, %v492
        %v528 = vadd.f32 %v415, %v495
        %v529 = vadd.f32 %v416, %v498
        %v530 = vadd.f32 %v417, %v501
        %v531 = vadd.f32 %v418, %v504
        %v532 = vadd.f32 %v419, %v507
        %v533 = vadd.f32 %v420, %v510
        %v534 = vadd.f32 %v421, %v513
        %v535 = vadd.f32 %v422, %v516
        %v536 = vadd.f32 %v423, %v519
        %537 = vst [vmem:[#allocation2] sm:$0xff] %v521
        %538 = vst [vmem:[#allocation2 + $0x8] sm:$0xff] %v522
        %539 = vst [vmem:[#allocation2 + $0x10] sm:$0xff] %v523
        %540 = vst [vmem:[#allocation2 + $0x18] sm:$0xff] %v524
        %541 = vst [vmem:[#allocation2 + $0x20] sm:$0xff] %v525
        %542 = vst [vmem:[#allocation2 + $0x28] sm:$0xff] %v526
        %543 = vst [vmem:[#allocation2 + $0x30] sm:$0xff] %v527
        %544 = vst [vmem:[#allocation2 + $0x38] sm:$0xff] %v528
        %545 = vst [vmem:[#allocation2 + $0x40] sm:$0xff] %v529
        %546 = vst [vmem:[#allocation2 + $0x48] sm:$0xff] %v530
        %547 = vst [vmem:[#allocation2 + $0x50] sm:$0xff] %v531
        %548 = vst [vmem:[#allocation2 + $0x58] sm:$0xff] %v532
        %549 = vst [vmem:[#allocation2 + $0x60] sm:$0xff] %v533
        %550 = vst [vmem:[#allocation2 + $0x68] sm:$0xff] %v534
        %551 = vst [vmem:[#allocation2 + $0x70] sm:$0xff] %v535
        %552 = vst [vmem:[#allocation2 + $0x78] sm:$0xff] %v536
        %p553 = scmp.eq.s32.totalorder %s22, 1
        // Predicated region
        $region87: #{gnn_classifier_forward.1} parent=77 // pred_check
          %p554 = pneg %p553
        $region88: #{gnn_classifier_forward.1} parent=77 // pred_check_branch
          %556 = sbr.rel (%p554) target = $region90
        $region89: #{gnn_classifier_forward.1} parent=77 // pred_region
          %v557 = vld [vmem:[#allocation2] sm:$0xff]
          %v558 = vld [vmem:[#allocation2 + $0x8] sm:$0xff]
          %v559 = vld [vmem:[#allocation2 + $0x10] sm:$0xff]
          %v560 = vld [vmem:[#allocation2 + $0x18] sm:$0xff]
          %v561 = vld [vmem:[#allocation2 + $0x20] sm:$0xff]
          %v562 = vld [vmem:[#allocation2 + $0x28] sm:$0xff]
          %v563 = vld [vmem:[#allocation2 + $0x30] sm:$0xff]
          %v564 = vld [vmem:[#allocation2 + $0x38] sm:$0xff]
          %v565 = vld [vmem:[#allocation2 + $0x40] sm:$0xff]
          %v566 = vld [vmem:[#allocation2 + $0x48] sm:$0xff]
          %v567 = vld [vmem:[#allocation2 + $0x50] sm:$0xff]
          %v568 = vld [vmem:[#allocation2 + $0x58] sm:$0xff]
          %v569 = vld [vmem:[#allocation2 + $0x60] sm:$0xff]
          %v570 = vld [vmem:[#allocation2 + $0x68] sm:$0xff]
          %v571 = vld [vmem:[#allocation2 + $0x70] sm:$0xff]
          %v572 = vld [vmem:[#allocation2 + $0x78] sm:$0xff]
          %v573 = vld [vmem:[%s2] sm:$0xff]
          %v574 = vld [vmem:[%s2 + $0x8] sm:$0xff]
          %v575 = vld [vmem:[%s2 + $0x10] sm:$0xff]
          %v576 = vld [vmem:[%s2 + $0x18] sm:$0xff]
          %v577 = vld [vmem:[%s2 + $0x20] sm:$0xff]
          %v578 = vld [vmem:[%s2 + $0x28] sm:$0xff]
          %v579 = vld [vmem:[%s2 + $0x30] sm:$0xff]
          %v580 = vld [vmem:[%s2 + $0x38] sm:$0xff]
          %v581 = vld [vmem:[%s2 + $0x40] sm:$0xff]
          %v582 = vld [vmem:[%s2 + $0x48] sm:$0xff]
          %v583 = vld [vmem:[%s2 + $0x50] sm:$0xff]
          %v584 = vld [vmem:[%s2 + $0x58] sm:$0xff]
          %v585 = vld [vmem:[%s2 + $0x60] sm:$0xff]
          %v586 = vld [vmem:[%s2 + $0x68] sm:$0xff]
          %v587 = vld [vmem:[%s2 + $0x70] sm:$0xff]
          %v588 = vld [vmem:[%s2 + $0x78] sm:$0xff]
          %v589 = vld [vmem:[%s3] sm:$0x1]
          %v591 = vperm.slane %v589, 0
          %593 = vmatpush.msra.mxu0 %v588
          %594 = vmatpush.msra.mxu0 %v587
          %595 = vmatpush.msra.mxu0 %v586
          %596 = vmatpush.msra.mxu0 %v585
          %597 = vmatpush.msra.mxu0 %v584
          %598 = vmatpush.msra.mxu0 %v583
          %599 = vmatpush.msra.mxu0 %v582
          %600 = vmatpush.msra.mxu0 %v581
          %601 = vmatpush.msra.mxu0 %v580
          %602 = vmatpush.msra.mxu0 %v579
          %603 = vmatpush.msra.mxu0 %v578
          %604 = vmatpush.msra.mxu0 %v577
          %605 = vmatpush.msra.mxu0 %v576
          %606 = vmatpush.msra.mxu0 %v575
          %607 = vmatpush.msra.mxu0 %v574
          %608 = vmatpush.msra.mxu0 %v573
          %609 = vmatmul.f32.gmra.mxu0 %v557
          %v610 = vpop.f32.mrf.mxu0
          %v611 = vadd.f32 %v591, %v610
          %612 = vmatmul.f32.gmra.mxu0 %v558
          %v613 = vpop.f32.mrf.mxu0
          %v614 = vadd.f32 %v591, %v613
          %615 = vmatmul.f32.gmra.mxu0 %v559
          %v616 = vpop.f32.mrf.mxu0
          %v617 = vadd.f32 %v591, %v616
          %618 = vmatmul.f32.gmra.mxu0 %v560
          %v619 = vpop.f32.mrf.mxu0
          %v620 = vadd.f32 %v591, %v619
          %621 = vmatmul.f32.gmra.mxu0 %v561
          %v622 = vpop.f32.mrf.mxu0
          %v623 = vadd.f32 %v591, %v622
          %624 = vmatmul.f32.gmra.mxu0 %v562
          %v625 = vpop.f32.mrf.mxu0
          %v626 = vadd.f32 %v591, %v625
          %627 = vmatmul.f32.gmra.mxu0 %v563
          %v628 = vpop.f32.mrf.mxu0
          %v629 = vadd.f32 %v591, %v628
          %630 = vmatmul.f32.gmra.mxu0 %v564
          %v631 = vpop.f32.mrf.mxu0
          %v632 = vadd.f32 %v591, %v631
          %633 = vmatmul.f32.gmra.mxu0 %v565
          %v634 = vpop.f32.mrf.mxu0
          %v635 = vadd.f32 %v591, %v634
          %636 = vmatmul.f32.gmra.mxu0 %v566
          %v637 = vpop.f32.mrf.mxu0
          %v638 = vadd.f32 %v591, %v637
          %639 = vmatmul.f32.gmra.mxu0 %v567
          %v640 = vpop.f32.mrf.mxu0
          %v641 = vadd.f32 %v591, %v640
          %642 = vmatmul.f32.gmra.mxu0 %v568
          %v643 = vpop.f32.mrf.mxu0
          %v644 = vadd.f32 %v591, %v643
          %645 = vmatmul.f32.gmra.mxu0 %v569
          %v646 = vpop.f32.mrf.mxu0
          %v647 = vadd.f32 %v591, %v646
          %648 = vmatmul.f32.gmra.mxu0 %v570
          %v649 = vpop.f32.mrf.mxu0
          %v650 = vadd.f32 %v591, %v649
          %651 = vmatmul.f32.gmra.mxu0 %v571
          %v652 = vpop.f32.mrf.mxu0
          %v653 = vadd.f32 %v591, %v652
          %654 = vmatmul.f32.gmra.mxu0 %v572
          %v655 = vpop.f32.mrf.mxu0
          %v656 = vadd.f32 %v591, %v655
          %657 = vdwg.mxu0
          %v658 = vmax.f32 %v611, 0.0
          %v659 = vmax.f32 %v614, 0.0
          %v660 = vmax.f32 %v617, 0.0
          %v661 = vmax.f32 %v620, 0.0
          %v662 = vmax.f32 %v623, 0.0
          %v663 = vmax.f32 %v626, 0.0
          %v664 = vmax.f32 %v629, 0.0
          %v665 = vmax.f32 %v632, 0.0
          %v666 = vmax.f32 %v635, 0.0
          %v667 = vmax.f32 %v638, 0.0
          %v668 = vmax.f32 %v641, 0.0
          %v669 = vmax.f32 %v644, 0.0
          %v670 = vmax.f32 %v647, 0.0
          %v671 = vmax.f32 %v650, 0.0
          %v672 = vmax.f32 %v653, 0.0
          %v673 = vmax.f32 %v656, 0.0
          %v674 = vld [vmem:[%s4] sm:$0xff]
          %v675 = vld [vmem:[%s4 + $0x8] sm:$0xff]
          %v676 = vld [vmem:[%s4 + $0x10] sm:$0xff]
          %v677 = vld [vmem:[%s4 + $0x18] sm:$0xff]
          %v678 = vld [vmem:[%s4 + $0x20] sm:$0xff]
          %v679 = vld [vmem:[%s4 + $0x28] sm:$0xff]
          %v680 = vld [vmem:[%s4 + $0x30] sm:$0xff]
          %v681 = vld [vmem:[%s4 + $0x38] sm:$0xff]
          %v682 = vld [vmem:[%s4 + $0x40] sm:$0xff]
          %v683 = vld [vmem:[%s4 + $0x48] sm:$0xff]
          %v684 = vld [vmem:[%s4 + $0x50] sm:$0xff]
          %v685 = vld [vmem:[%s4 + $0x58] sm:$0xff]
          %v686 = vld [vmem:[%s4 + $0x60] sm:$0xff]
          %v687 = vld [vmem:[%s4 + $0x68] sm:$0xff]
          %v688 = vld [vmem:[%s4 + $0x70] sm:$0xff]
          %v689 = vld [vmem:[%s4 + $0x78] sm:$0xff]
          %v690 = vld [vmem:[%s5] sm:$0x1]
          %v692 = vperm.slane %v690, 0
          %694 = vmatpush.msra.mxu0 %v689
          %695 = vmatpush.msra.mxu0 %v688
          %696 = vmatpush.msra.mxu0 %v687
          %697 = vmatpush.msra.mxu0 %v686
          %698 = vmatpush.msra.mxu0 %v685
          %699 = vmatpush.msra.mxu0 %v684
          %700 = vmatpush.msra.mxu0 %v683
          %701 = vmatpush.msra.mxu0 %v682
          %702 = vmatpush.msra.mxu0 %v681
          %703 = vmatpush.msra.mxu0 %v680
          %704 = vmatpush.msra.mxu0 %v679
          %705 = vmatpush.msra.mxu0 %v678
          %706 = vmatpush.msra.mxu0 %v677
          %707 = vmatpush.msra.mxu0 %v676
          %708 = vmatpush.msra.mxu0 %v675
          %709 = vmatpush.msra.mxu0 %v674
          %710 = vmatmul.f32.gmra.mxu0 %v658
          %v711 = vpop.f32.mrf.mxu0
          %v712 = vadd.f32 %v692, %v711
          %713 = vmatmul.f32.gmra.mxu0 %v659
          %v714 = vpop.f32.mrf.mxu0
          %v715 = vadd.f32 %v692, %v714
          %716 = vmatmul.f32.gmra.mxu0 %v660
          %v717 = vpop.f32.mrf.mxu0
          %v718 = vadd.f32 %v692, %v717
          %719 = vmatmul.f32.gmra.mxu0 %v661
          %v720 = vpop.f32.mrf.mxu0
          %v721 = vadd.f32 %v692, %v720
          %722 = vmatmul.f32.gmra.mxu0 %v662
          %v723 = vpop.f32.mrf.mxu0
          %v724 = vadd.f32 %v692, %v723
          %725 = vmatmul.f32.gmra.mxu0 %v663
          %v726 = vpop.f32.mrf.mxu0
          %v727 = vadd.f32 %v692, %v726
          %728 = vmatmul.f32.gmra.mxu0 %v664
          %v729 = vpop.f32.mrf.mxu0
          %v730 = vadd.f32 %v692, %v729
          %731 = vmatmul.f32.gmra.mxu0 %v665
          %v732 = vpop.f32.mrf.mxu0
          %v733 = vadd.f32 %v692, %v732
          %734 = vmatmul.f32.gmra.mxu0 %v666
          %v735 = vpop.f32.mrf.mxu0
          %v736 = vadd.f32 %v692, %v735
          %737 = vmatmul.f32.gmra.mxu0 %v667
          %v738 = vpop.f32.mrf.mxu0
          %v739 = vadd.f32 %v692, %v738
          %740 = vmatmul.f32.gmra.mxu0 %v668
          %v741 = vpop.f32.mrf.mxu0
          %v742 = vadd.f32 %v692, %v741
          %743 = vmatmul.f32.gmra.mxu0 %v669
          %v744 = vpop.f32.mrf.mxu0
          %v745 = vadd.f32 %v692, %v744
          %746 = vmatmul.f32.gmra.mxu0 %v670
          %v747 = vpop.f32.mrf.mxu0
          %v748 = vadd.f32 %v692, %v747
          %749 = vmatmul.f32.gmra.mxu0 %v671
          %v750 = vpop.f32.mrf.mxu0
          %v751 = vadd.f32 %v692, %v750
          %752 = vmatmul.f32.gmra.mxu0 %v672
          %v753 = vpop.f32.mrf.mxu0
          %v754 = vadd.f32 %v692, %v753
          %755 = vmatmul.f32.gmra.mxu0 %v673
          %v756 = vpop.f32.mrf.mxu0
          %v757 = vadd.f32 %v692, %v756
          %758 = vdwg.mxu0
          %759 = vst [vmem:[%s386] sm:$0xff] %v712
          %760 = vst [vmem:[%s386 + $0x8] sm:$0xff] %v715
          %761 = vst [vmem:[%s386 + $0x10] sm:$0xff] %v718
          %762 = vst [vmem:[%s386 + $0x18] sm:$0xff] %v721
          %763 = vst [vmem:[%s386 + $0x20] sm:$0xff] %v724
          %764 = vst [vmem:[%s386 + $0x28] sm:$0xff] %v727
          %765 = vst [vmem:[%s386 + $0x30] sm:$0xff] %v730
          %766 = vst [vmem:[%s386 + $0x38] sm:$0xff] %v733
          %767 = vst [vmem:[%s386 + $0x40] sm:$0xff] %v736
          %768 = vst [vmem:[%s386 + $0x48] sm:$0xff] %v739
          %769 = vst [vmem:[%s386 + $0x50] sm:$0xff] %v742
          %770 = vst [vmem:[%s386 + $0x58] sm:$0xff] %v745
          %771 = vst [vmem:[%s386 + $0x60] sm:$0xff] %v748
          %772 = vst [vmem:[%s386 + $0x68] sm:$0xff] %v751
          %773 = vst [vmem:[%s386 + $0x70] sm:$0xff] %v754
          %774 = vst [vmem:[%s386 + $0x78] sm:$0xff] %v757
        $region90: #{gnn_classifier_forward.1} parent=77 // pred_fallthru
          _
        %s775 = smul.u32 16, %s21
        %p776 = scmp.lt.s32.totalorder %s775, 31
        %s777 = scalar_select %p776, %s775, 31
        %s778 = smul.addr %s777, 8
        %s779 = scalar_lea.vmem %s6, %s778
        // Predicated region
        $region91: #{gnn_classifier_forward.1} parent=77 // pred_check
          %p780 = pneg %p185
        $region92: #{gnn_classifier_forward.1} parent=77 // pred_check_branch
          %782 = sbr.rel (%p780) target = $region94
        $region93: #{gnn_classifier_forward.1} parent=77 // pred_region
          %s783 = smul.u32 16, %s21
        $region94: #{gnn_classifier_forward.1} parent=77 // pred_fallthru
          _
      $region78: #{gnn_classifier_forward.1} parent=5 // pred_fallthru
        _
      %p784 = scmp.le.s32.totalorder 2, %s12
      // Predicated region
      $region95: #{gnn_classifier_forward.1} parent=5 // pred_check
        %p785 = pneg %p784
      $region96: #{gnn_classifier_forward.1} parent=5 // pred_check_branch
        %787 = sbr.rel (%p785) target = $region98
      $region97: #{gnn_classifier_forward.1} parent=5 // pred_region
        %s788 = ssub.s32 %s12, 2
        // Predicated region
        $region99: #{gnn_classifier_forward.1} parent=97 // pred_check
          %p789 = pneg %p191
        $region100: #{gnn_classifier_forward.1} parent=97 // pred_check_branch
          %791 = sbr.rel (%p789) target = $region102
        $region101: #{gnn_classifier_forward.1} parent=97 // pred_region
          %s792 = smul.u32 16, %s23
          %p793 = scmp.lt.s32.totalorder %s792, 31
          %s794 = scalar_select %p793, %s792, 31
          %s795 = smul.addr %s794, 8
          %s796 = scalar_lea.vmem %s6, %s795
        $region102: #{gnn_classifier_forward.1} parent=97 // pred_fallthru
          _
      $region98: #{gnn_classifier_forward.1} parent=5 // pred_fallthru
        _
    $region6: #{gnn_classifier_forward.1} parent=1 // loop_footer
      %s16 = sadd.s32 1, %s12
    $region7: #{gnn_classifier_forward.1} parent=1 // loop_footer_branch
      %11 = sbr.rel target = $region3
    $region8: #{gnn_classifier_forward.1} parent=1 // loop_exit
      _

</llo_original>
